<compile_context>
chip_gen: v7x
topology: tpu7x:2x2x1
jax: 0.10.0
libtpu: 0.0.40
codegen_flags: <defaults>
</compile_context>

<pallas_src>
import functools

import jax
import jax.numpy as jnp
from jax.experimental import pallas as pl
from jax.experimental.pallas import tpu as pltpu

LANE = 128     # TPU lane width (last-dim tile)
SUBLANE = 8    # f32 sublane tile


def _round_up(n, m):
    return ((n + m - 1) // m) * m


def _dqn_kernel(x_ref, w1_ref, b1_ref, w2_ref, b2_ref, w3_ref, b3_ref, o_ref):
    # fc1 + ReLU.  x arrives f32; cast to the operand dtype carried by the
    # weights (no-op for f32, cheap VPU cast for bf16).  MXU accumulates f32.
    x = x_ref[...].astype(w1_ref.dtype)
    h1 = jnp.dot(x, w1_ref[...], preferred_element_type=jnp.float32)
    h1 = jnp.maximum(h1 + b1_ref[...].astype(jnp.float32), 0.0)
    # fc2 + ReLU
    h2 = jnp.dot(h1.astype(w2_ref.dtype), w2_ref[...],
                 preferred_element_type=jnp.float32)
    h2 = jnp.maximum(h2 + b2_ref[...].astype(jnp.float32), 0.0)
    # fc3 (no activation); output is the real 4-wide action dim (masked vst).
    out = jnp.dot(h2.astype(w3_ref.dtype), w3_ref[...],
                  preferred_element_type=jnp.float32)
    o_ref[...] = (out + b3_ref[...].astype(jnp.float32)).astype(o_ref.dtype)


def _batch_axis_semantics(num_steps):
    """CORE_PARALLEL on v7x (2 TCs) when the grid splits evenly; else parallel."""
    kind = ""
    try:
        kind = jax.devices()[0].device_kind.lower()
    except Exception:
        pass
    if "v7" in kind and num_steps % 2 == 0:
        return (pltpu.CORE_PARALLEL,)
    return ("parallel",)


@functools.partial(jax.jit, static_argnames=("block_b",))
def dqn_forward(x, w1, b1, w2, b2, w3, b3, *, block_b=256):
    """Fused DQN forward.

    x:      [B, state_size] f32
    w1/b1:  [state_size, h1_pad] / [1, h1_pad]   (h1_pad = 150 -> 256)
    w2/b2:  [h1_pad, h2_pad]     / [1, h2_pad]   (h2_pad = 120 -> 128)
    w3/b3:  [h2_pad, action]     / [1, action]   (action dim unpadded)
    Weights may be f32 or bf16 (bf16 halves weight DMA on every generation);
    biases are f32; accumulation / bias-add / ReLU are always f32.
    """
    B, S = x.shape
    n_out = w3.shape[1]

    # Batch tile: multiple of the f32 sublane (8), capped by block_b.  256 by
    # default so B>=1024 runs several pipeline steps (DMA/compute overlap).
    tb = min(_round_up(block_b, SUBLANE), _round_up(B, SUBLANE))
    b_pad = _round_up(B, tb)
    if b_pad != B:
        # Only the narrow (., 8) input needs row padding, and only when B does
        # not divide by the tile (trace-time conditional -> no op otherwise).
        x = jnp.pad(x, ((0, b_pad - B), (0, 0)))
    num_steps = b_pad // tb

    def resident(shape):
        # Full-array block with a constant block index -> stays VMEM-resident
        # across every grid step (weights/biases fetched once).
        return pl.BlockSpec(shape, lambda i: (0,) * len(shape))

    out = pl.pallas_call(
        _dqn_kernel,
        out_shape=jax.ShapeDtypeStruct((b_pad, n_out), jnp.float32),
        grid_spec=pltpu.PrefetchScalarGridSpec(
            num_scalar_prefetch=0,
            grid=(num_steps,),
            in_specs=[
                # x batch tile: last dim equals the full array dim (8), so no
                # 8->128 padding is needed.
                pl.BlockSpec((tb, S), lambda i: (i, 0)),
                resident(w1.shape), resident(b1.shape),
                resident(w2.shape), resident(b2.shape),
                resident(w3.shape), resident(b3.shape),
            ],
            out_specs=pl.BlockSpec((tb, n_out), lambda i: (i, 0)),
        ),
        compiler_params=pltpu.CompilerParams(
            dimension_semantics=_batch_axis_semantics(num_steps),
        ),
    )(x, w1, b1, w2, b2, w3, b3)

    if b_pad != B:
        out = out[:B]
    return out


def init_dqn_params(key, state_size, action_size, fc1_units=150, fc2_units=120):
    """PyTorch-nn.Linear-style init (uniform(-1/sqrt(fan_in), +1/sqrt(fan_in))).

    Weights are returned already transposed to [in, out]; these are the
    *logical* (unpadded) params used by the pure-JAX reference.
    """
    def linear(key, fan_in, fan_out):
        kw, kb = jax.random.split(key)
        bound = 1.0 / jnp.sqrt(jnp.float32(fan_in))
        w = jax.random.uniform(kw, (fan_in, fan_out), jnp.float32, -bound, bound)
        b = jax.random.uniform(kb, (1, fan_out), jnp.float32, -bound, bound)
        return w, b

    k1, k2, k3 = jax.random.split(key, 3)
    w1, b1 = linear(k1, state_size, fc1_units)
    w2, b2 = linear(k2, fc1_units, fc2_units)
    w3, b3 = linear(k3, fc2_units, action_size)
    return w1, b1, w2, b2, w3, b3


def pad_dqn_params(params, dtype=jnp.float32):
    """Zero-pad only the hidden dims to multiples of 128; cast weights to `dtype`.

    The state (8) and action (4) dims stay at their logical sizes (legal as
    full-array BlockSpec dims) so input/output HBM traffic stays minimal.
    Zero padding keeps padded hidden channels exactly zero, so results on the
    f32 path are bit-exact.  Biases are always stored f32 (they are tiny and
    the bias-add runs in f32 anyway).
    """
    w1, b1, w2, b2, w3, b3 = params
    h1_p = _round_up(w1.shape[1], LANE)  # 150 -> 256
    h2_p = _round_up(w2.shape[1], LANE)  # 120 -> 128

    def pad_w(w, rows, cols):
        out = jnp.zeros((rows, cols), dtype=dtype)
        return out.at[: w.shape[0], : w.shape[1]].set(w.astype(dtype))

    def pad_b(b, cols):
        out = jnp.zeros((1, cols), dtype=jnp.float32)
        return out.at[:, : b.shape[1]].set(b.astype(jnp.float32))

    return (
        pad_w(w1, w1.shape[0], h1_p), pad_b(b1, h1_p),   # (8, 256),  (1, 256)
        pad_w(w2, h1_p, h2_p),        pad_b(b2, h2_p),   # (256,128), (1, 128)
        pad_w(w3, h2_p, w3.shape[1]), pad_b(b3, w3.shape[1]),  # (128,4), (1,4)
    )


if __name__ == "__main__":
    # LunarLander-v2: state_size=8, action_size=4.
    state_size, action_size = 8, 4

    key = jax.random.PRNGKey(0)
    key_params, key_x, key_xl = jax.random.split(key, 3)

    params = init_dqn_params(key_params, state_size, action_size)
    w1, b1, w2, b2, w3, b3 = params

    def reference(x):
        h = jnp.maximum(x @ w1 + b1, 0.0)
        h = jnp.maximum(h @ w2 + b2, 0.0)
        return h @ w3 + b3

    # ---- small-batch path (partial batch tile; tight check vs reference) ----
    x_small = jax.random.normal(key_x, (2, state_size), jnp.float32)
    params_f32 = pad_dqn_params(params, jnp.float32)
    q_small = jax.block_until_ready(dqn_forward(x_small, *params_f32))
    assert q_small.shape == (2, action_size)
    assert jnp.allclose(q_small, reference(x_small), atol=1e-4, rtol=1e-4)

    # ---- multi-step grid path (B divides the tile -> zero wrapper ops) ----
    x_big = jax.random.normal(key_xl, (512, state_size), jnp.float32)
    q_big = jax.block_until_ready(dqn_forward(x_big, *params_f32, block_b=256))
    assert q_big.shape == (512, action_size)
    assert jnp.allclose(q_big, reference(x_big), atol=1e-4, rtol=1e-4)

    # ---- bf16 weight path (all generations: halves weight DMA bytes;
    #      f32 accumulation / bias-add / ReLU, loose tolerance) ----
    params_bf16 = pad_dqn_params(params, jnp.bfloat16)
    q_bf16 = jax.block_until_ready(dqn_forward(x_big, *params_bf16, block_b=256))
    assert q_bf16.shape == (512, action_size)
    assert jnp.allclose(q_bf16, reference(x_big), atol=1e-1, rtol=1e-1)

    print("KERNEL_OK")
</pallas_src>

<mosaic_0001>
module attributes {stable_mosaic.version = 11 : i64} {
  func.func @_dqn_kernel(%arg0: i32, %arg1: memref<8x8xf32, #tpu.memory_space<vmem>>, %arg2: memref<8x256xf32, #tpu.memory_space<vmem>>, %arg3: memref<1x256xf32, #tpu.memory_space<vmem>>, %arg4: memref<256x128xf32, #tpu.memory_space<vmem>>, %arg5: memref<1x128xf32, #tpu.memory_space<vmem>>, %arg6: memref<128x4xf32, #tpu.memory_space<vmem>>, %arg7: memref<1x4xf32, #tpu.memory_space<vmem>>, %arg8: memref<8x4xf32, #tpu.memory_space<vmem>>) attributes {dimension_semantics = [#tpu.dimension_semantics<parallel>], iteration_bounds = array<i64: 1>, scalar_prefetch = 0 : i64, scratch_operands = 0 : i64, tpu.core_type = #tpu.core_type<tc>, window_params = [{transform_indices = @transform_0, window_bounds = array<i64: 8, 8>}, {pipeline_mode = #tpu.pipeline_mode<synchronous>, transform_indices = @transform_1, window_bounds = array<i64: 8, 256>}, {pipeline_mode = #tpu.pipeline_mode<synchronous>, transform_indices = @transform_2, window_bounds = array<i64: 1, 256>}, {pipeline_mode = #tpu.pipeline_mode<synchronous>, transform_indices = @transform_3, window_bounds = array<i64: 256, 128>}, {pipeline_mode = #tpu.pipeline_mode<synchronous>, transform_indices = @transform_4, window_bounds = array<i64: 1, 128>}, {pipeline_mode = #tpu.pipeline_mode<synchronous>, transform_indices = @transform_5, window_bounds = array<i64: 128, 4>}, {pipeline_mode = #tpu.pipeline_mode<synchronous>, transform_indices = @transform_6, window_bounds = array<i64: 1, 4>}, {transform_indices = @transform_7, window_bounds = array<i64: 8, 4>}]} {
    %c0 = arith.constant 0 : index
    %c0_0 = arith.constant 0 : index
    %0 = vector.load %arg1[%c0, %c0_0] : memref<8x8xf32, #tpu.memory_space<vmem>>, vector<8x8xf32>
    %c0_1 = arith.constant 0 : index
    %c0_2 = arith.constant 0 : index
    %1 = vector.load %arg2[%c0_1, %c0_2] : memref<8x256xf32, #tpu.memory_space<vmem>>, vector<8x256xf32>
    %cst = arith.constant dense<0.000000e+00> : vector<8x256xf32>
    %2 = tpu.matmul %0, %1, %cst {dimension_numbers = #tpu.dot_dimension_numbers<[1], [0], [0], [1], [0, 0, 1, 1], [], []>} : vector<8x8xf32>, vector<8x256xf32>, vector<8x256xf32> -> vector<8x256xf32>
    %c0_3 = arith.constant 0 : index
    %c0_4 = arith.constant 0 : index
    %3 = vector.load %arg3[%c0_3, %c0_4] : memref<1x256xf32, #tpu.memory_space<vmem>>, vector<1x256xf32>
    %4 = vector.broadcast %3 : vector<1x256xf32> to vector<8x256xf32>
    %5 = arith.addf %2, %4 : vector<8x256xf32>
    %cst_5 = arith.constant 0.000000e+00 : f32
    %6 = vector.broadcast %cst_5 : f32 to vector<8x256xf32>
    %7 = arith.maximumf %5, %6 : vector<8x256xf32>
    %c0_6 = arith.constant 0 : index
    %c0_7 = arith.constant 0 : index
    %8 = vector.load %arg4[%c0_6, %c0_7] : memref<256x128xf32, #tpu.memory_space<vmem>>, vector<256x128xf32>
    %cst_8 = arith.constant dense<0.000000e+00> : vector<8x128xf32>
    %9 = tpu.matmul %7, %8, %cst_8 {dimension_numbers = #tpu.dot_dimension_numbers<[1], [0], [0], [1], [0, 0, 1, 1], [], []>} : vector<8x256xf32>, vector<256x128xf32>, vector<8x128xf32> -> vector<8x128xf32>
    %c0_9 = arith.constant 0 : index
    %c0_10 = arith.constant 0 : index
    %10 = vector.load %arg5[%c0_9, %c0_10] : memref<1x128xf32, #tpu.memory_space<vmem>>, vector<1x128xf32>
    %11 = vector.broadcast %10 : vector<1x128xf32> to vector<8x128xf32>
    %12 = arith.addf %9, %11 : vector<8x128xf32>
    %cst_11 = arith.constant 0.000000e+00 : f32
    %13 = vector.broadcast %cst_11 : f32 to vector<8x128xf32>
    %14 = arith.maximumf %12, %13 : vector<8x128xf32>
    %c0_12 = arith.constant 0 : index
    %c0_13 = arith.constant 0 : index
    %15 = vector.load %arg6[%c0_12, %c0_13] : memref<128x4xf32, #tpu.memory_space<vmem>>, vector<128x4xf32>
    %cst_14 = arith.constant dense<0.000000e+00> : vector<8x4xf32>
    %16 = tpu.matmul %14, %15, %cst_14 {dimension_numbers = #tpu.dot_dimension_numbers<[1], [0], [0], [1], [0, 0, 1, 1], [], []>} : vector<8x128xf32>, vector<128x4xf32>, vector<8x4xf32> -> vector<8x4xf32>
    %c0_15 = arith.constant 0 : index
    %c0_16 = arith.constant 0 : index
    %17 = vector.load %arg7[%c0_15, %c0_16] : memref<1x4xf32, #tpu.memory_space<vmem>>, vector<1x4xf32>
    %18 = vector.broadcast %17 : vector<1x4xf32> to vector<8x4xf32>
    %19 = arith.addf %16, %18 : vector<8x4xf32>
    %c0_17 = arith.constant 0 : index
    %c0_18 = arith.constant 0 : index
    %20 = vector.load %arg8[%c0_17, %c0_18] : memref<8x4xf32, #tpu.memory_space<vmem>>, vector<8x4xf32>
    tpu.vector_store %arg8[%c0_17, %c0_18], %19 {strides = array<i32>} : memref<8x4xf32, #tpu.memory_space<vmem>>, vector<8x4xf32>,
    return
  }
  func.func @transform_0(%arg0: i32) -> (i32, i32) {
    %c0_i32 = arith.constant 0 : i32
    %c0_i32_0 = arith.constant 0 : i32
    return %arg0, %c0_i32 : i32, i32
  }
  func.func @transform_1(%arg0: i32) -> (i32, i32) {
    %c0_i32 = arith.constant 0 : i32
    %c0_i32_0 = arith.constant 0 : i32
    %c0_i32_1 = arith.constant 0 : i32
    return %c0_i32, %c0_i32_0 : i32, i32
  }
  func.func @transform_2(%arg0: i32) -> (i32, i32) {
    %c0_i32 = arith.constant 0 : i32
    %c0_i32_0 = arith.constant 0 : i32
    %c0_i32_1 = arith.constant 0 : i32
    return %c0_i32, %c0_i32_0 : i32, i32
  }
  func.func @transform_3(%arg0: i32) -> (i32, i32) {
    %c0_i32 = arith.constant 0 : i32
    %c0_i32_0 = arith.constant 0 : i32
    %c0_i32_1 = arith.constant 0 : i32
    return %c0_i32, %c0_i32_0 : i32, i32
  }
  func.func @transform_4(%arg0: i32) -> (i32, i32) {
    %c0_i32 = arith.constant 0 : i32
    %c0_i32_0 = arith.constant 0 : i32
    %c0_i32_1 = arith.constant 0 : i32
    return %c0_i32, %c0_i32_0 : i32, i32
  }
  func.func @transform_5(%arg0: i32) -> (i32, i32) {
    %c0_i32 = arith.constant 0 : i32
    %c0_i32_0 = arith.constant 0 : i32
    %c0_i32_1 = arith.constant 0 : i32
    return %c0_i32, %c0_i32_0 : i32, i32
  }
  func.func @transform_6(%arg0: i32) -> (i32, i32) {
    %c0_i32 = arith.constant 0 : i32
    %c0_i32_0 = arith.constant 0 : i32
    %c0_i32_1 = arith.constant 0 : i32
    return %c0_i32, %c0_i32_0 : i32, i32
  }
  func.func @transform_7(%arg0: i32) -> (i32, i32) {
    %c0_i32 = arith.constant 0 : i32
    %c0_i32_0 = arith.constant 0 : i32
    return %arg0, %c0_i32 : i32, i32
  }
}

</mosaic_0001>

<llo_original>
// kernel: dqn_forward.1
$region0: #{dqn_forward.1}
  #allocation0 [shape = 'u32[]', space=smem, size = 0x4, offset = 0x4, fixed_abs, tag = 'smem constant byte address 0x4 - core index']
  #allocation1 [shape = 'u32[144,128]{1,0:T(1,128)}', space=vmem, size = 0x12000, scoped, tag = 'internal scratch']
  %s0 = inlined_call_operand.vmem [shape: f32[8,8], index: 0, kind: input, shape index: {}]
  %s1 = inlined_call_operand.vmem [shape: f32[8,256], index: 1, kind: input, shape index: {}]
  %s2 = inlined_call_operand.vmem [shape: f32[1,256], index: 2, kind: input, shape index: {}]
  %s3 = inlined_call_operand.hbm [shape: f32[256,128], index: 3, kind: input, shape index: {}]
  %s4 = inlined_call_operand.vmem [shape: f32[1,128], index: 4, kind: input, shape index: {}]
  %s5 = inlined_call_operand.vmem [shape: f32[128,4], index: 5, kind: input, shape index: {}]
  %s6 = inlined_call_operand.vmem [shape: f32[1,4], index: 6, kind: input, shape index: {}]
  %s7 = inlined_call_operand.vmem [shape: f32[8,4], index: 7, kind: output, shape index: {}]
  %s8 = sld [smem:[#allocation0]]
  $region42: #{dqn_forward.1} parent=0
    _
  %s10 = ssub.s32 1, %s8
  %s11 = scalar_select 0, %s10, %s8
  $region1: #{dqn_forward.1} parent=0
    #allocation2 [shape = 'u8[131072]{0}', space=vmem, size = 0x20000, scoped, tag = 'input window, operand 3, single buffered']
    #allocation3 [shape = 's32[1]{0}', space=sflag, size = 0x4, scoped, tag = 'scoped memory for dqn_forward.1']
    %12 = vsyncpa [#allocation3], 0
    // Predicated region
    $region2: #{dqn_forward.1} parent=1 // pred_check
      _
    $region3: #{dqn_forward.1} parent=1 // pred_check_branch
      %14 = sbr.rel (0) target = $region5
    $region4: #{dqn_forward.1} parent=1 // pred_region
      _
    $region5: #{dqn_forward.1} parent=1 // pred_fallthru
      _
    // Predicated region
    $region6: #{dqn_forward.1} parent=1 // pred_check
      _
    $region7: #{dqn_forward.1} parent=1 // pred_check_branch
      %16 = sbr.rel (0) target = $region9
    $region8: #{dqn_forward.1} parent=1 // pred_region
      _
    $region9: #{dqn_forward.1} parent=1 // pred_fallthru
      _
    // Predicated region
    $region10: #{dqn_forward.1} parent=1 // pred_check
      _
    $region11: #{dqn_forward.1} parent=1 // pred_check_branch
      %18 = sbr.rel (0) target = $region13
    $region12: #{dqn_forward.1} parent=1 // pred_region
      _
    $region13: #{dqn_forward.1} parent=1 // pred_fallthru
      _
    // Predicated region
    $region14: #{dqn_forward.1} parent=1 // pred_check
      _
    $region15: #{dqn_forward.1} parent=1 // pred_check_branch
      %20 = sbr.rel (0) target = $region17
    $region16: #{dqn_forward.1} parent=1 // pred_region
      %s22 = ssub.s32 4096, 4096
      %23 = vsyncadd [#allocation3], %s22
      %s24 = sshll.u32 [#allocation2], 4
      %s25 = int_to_ptr.vmem [resolvable:$true] %s24
      %30 = dma.hbm_to_vmem [thread:$0]  %s3, 4096, %s25, [#allocation3], 128, 128, 8
    $region17: #{dqn_forward.1} parent=1 // pred_fallthru
      _
    // Predicated region
    $region18: #{dqn_forward.1} parent=1 // pred_check
      _
    $region19: #{dqn_forward.1} parent=1 // pred_check_branch
      %32 = sbr.rel (0) target = $region21
    $region20: #{dqn_forward.1} parent=1 // pred_region
      _
    $region21: #{dqn_forward.1} parent=1 // pred_fallthru
      _
    // Predicated region
    $region22: #{dqn_forward.1} parent=1 // pred_check
      _
    $region23: #{dqn_forward.1} parent=1 // pred_check_branch
      %34 = sbr.rel (0) target = $region25
    $region24: #{dqn_forward.1} parent=1 // pred_region
      _
    $region25: #{dqn_forward.1} parent=1 // pred_fallthru
      _
    // Predicated region
    $region26: #{dqn_forward.1} parent=1 // pred_check
      _
    $region27: #{dqn_forward.1} parent=1 // pred_check_branch
      %36 = sbr.rel (0) target = $region29
    $region28: #{dqn_forward.1} parent=1 // pred_region
      _
    $region29: #{dqn_forward.1} parent=1 // pred_fallthru
      _
    // Predicated region
    $region30: #{dqn_forward.1} parent=1 // pred_check
      _
    $region31: #{dqn_forward.1} parent=1 // pred_check_branch
      %38 = sbr.rel (0) target = $region33
    $region32: #{dqn_forward.1} parent=1 // pred_region
      %39 = dma.done [#allocation3], 4096
    $region33: #{dqn_forward.1} parent=1 // pred_fallthru
      _
    %v40 = vld [vmem:[%s0] sm:$0xff]
    %v41 = vld [vmem:[%s1] sm:$0xff]
    %v42 = vld [vmem:[%s1 + $0x8] sm:$0xff]
    %v43 = vld [vmem:[%s2] sm:$0x3]
    %v45 = vlaneseq
    %v46 = vshrl.u32 %v45, 7
    %v47 = vsub.s32 0, %v46
    %v48 = vrot.slane %v43, %v47
    %v49 = vlaneseq
    %v50 = vshrl.u32 %v49, 7
    %v51 = vsub.s32 1, %v50
    %v52 = vrot.slane %v43, %v51
    %vm55 = vcmask 64512
    %v57 = vsel %vm55, %v40, 0
    %59 = vmatprep.subr.mxu0 %v42
    %60 = vmatpush1.msra.mxu0 %v41
    %61 = vmatprep.subr.mxu0 0.0
    %62 = vmatpush1.msra.mxu0 0.0
    %63 = vmatprep.subr.mxu0 0.0
    %64 = vmatpush1.msra.mxu0 0.0
    %65 = vmatprep.subr.mxu0 0.0
    %66 = vmatpush1.msra.mxu0 0.0
    %67 = vmatprep.subr.mxu0 0.0
    %68 = vmatpush1.msra.mxu0 0.0
    %69 = vmatprep.subr.mxu0 0.0
    %70 = vmatpush1.msra.mxu0 0.0
    %71 = vmatprep.subr.mxu0 0.0
    %72 = vmatpush1.msra.mxu0 0.0
    %73 = vmatprep.subr.mxu0 0.0
    %74 = vmatpush1.msra.mxu0 0.0
    %75 = vmatprep.subr.mxu0 0.0
    %76 = vmatpush1.msra.mxu0 0.0
    %77 = vmatprep.subr.mxu0 0.0
    %78 = vmatpush1.msra.mxu0 0.0
    %79 = vmatprep.subr.mxu0 0.0
    %80 = vmatpush1.msra.mxu0 0.0
    %81 = vmatprep.subr.mxu0 0.0
    %82 = vmatpush1.msra.mxu0 0.0
    %83 = vmatprep.subr.mxu0 0.0
    %84 = vmatpush1.msra.mxu0 0.0
    %85 = vmatprep.subr.mxu0 0.0
    %86 = vmatpush1.msra.mxu0 0.0
    %87 = vmatprep.subr.mxu0 0.0
    %88 = vmatpush1.msra.mxu0 0.0
    %89 = vmatprep.subr.mxu0 0.0
    %90 = vmatpush1.msra.mxu0 0.0
    %91 = vmatprep.subr.mxu0 0.0
    %92 = vmatpush1.msra.mxu0 0.0
    %93 = vmatprep.subr.mxu0 0.0
    %94 = vmatpush1.msra.mxu0 0.0
    %95 = vmatprep.subr.mxu0 0.0
    %96 = vmatpush1.msra.mxu0 0.0
    %97 = vmatprep.subr.mxu0 0.0
    %98 = vmatpush1.msra.mxu0 0.0
    %99 = vmatprep.subr.mxu0 0.0
    %100 = vmatpush1.msra.mxu0 0.0
    %101 = vmatprep.subr.mxu0 0.0
    %102 = vmatpush1.msra.mxu0 0.0
    %103 = vmatprep.subr.mxu0 0.0
    %104 = vmatpush1.msra.mxu0 0.0
    %105 = vmatprep.subr.mxu0 0.0
    %106 = vmatpush1.msra.mxu0 0.0
    %107 = vmatprep.subr.mxu0 0.0
    %108 = vmatpush1.msra.mxu0 0.0
    %109 = vmatprep.subr.mxu0 0.0
    %110 = vmatpush1.msra.mxu0 0.0
    %111 = vmatprep.subr.mxu0 0.0
    %112 = vmatpush1.msra.mxu0 0.0
    %113 = vmatprep.subr.mxu0 0.0
    %114 = vmatpush1.msra.mxu0 0.0
    %115 = vmatprep.subr.mxu0 0.0
    %116 = vmatpush1.msra.mxu0 0.0
    %117 = vmatprep.subr.mxu0 0.0
    %118 = vmatpush1.msra.mxu0 0.0
    %119 = vmatprep.subr.mxu0 0.0
    %120 = vmatpush1.msra.mxu0 0.0
    %121 = vmatprep.subr.mxu0 0.0
    %122 = vmatpush1.msra.mxu0 0.0
    %123 = vmatprep.mubr.f32.mxu0 0.0
    %124 = vmatmul.mubr.f32.gmra.mrb[0].mxu0 %v57
    %v125 = vpop.f32.mrb[0].mxu0
    %v126 = vadd.f32 %v48, %v125
    %v127 = vpop.f32.mrb[0].mxu0
    %v128 = vadd.f32 %v52, %v127
    %129 = vdwg.mxu0
    %v130 = vmax.f32 %v126, 0.0
    %v131 = vmax.f32 %v128, 0.0
    %v132 = vld [vmem:[#allocation2] sm:$0xff]
    %v133 = vld [vmem:[#allocation2 + $0x8] sm:$0xff]
    %v134 = vld [vmem:[#allocation2 + $0x10] sm:$0xff]
    %v135 = vld [vmem:[#allocation2 + $0x18] sm:$0xff]
    %v136 = vld [vmem:[#allocation2 + $0x20] sm:$0xff]
    %v137 = vld [vmem:[#allocation2 + $0x28] sm:$0xff]
    %v138 = vld [vmem:[#allocation2 + $0x30] sm:$0xff]
    %v139 = vld [vmem:[#allocation2 + $0x38] sm:$0xff]
    %v140 = vld [vmem:[#allocation2 + $0x40] sm:$0xff]
    %v141 = vld [vmem:[#allocation2 + $0x48] sm:$0xff]
    %v142 = vld [vmem:[#allocation2 + $0x50] sm:$0xff]
    %v143 = vld [vmem:[#allocation2 + $0x58] sm:$0xff]
    %v144 = vld [vmem:[#allocation2 + $0x60] sm:$0xff]
    %v145 = vld [vmem:[#allocation2 + $0x68] sm:$0xff]
    %v146 = vld [vmem:[#allocation2 + $0x70] sm:$0xff]
    %v147 = vld [vmem:[#allocation2 + $0x78] sm:$0xff]
    %v148 = vld [vmem:[#allocation2 + $0x80] sm:$0xff]
    %v149 = vld [vmem:[#allocation2 + $0x88] sm:$0xff]
    %v150 = vld [vmem:[#allocation2 + $0x90] sm:$0xff]
    %v151 = vld [vmem:[#allocation2 + $0x98] sm:$0xff]
    %v152 = vld [vmem:[#allocation2 + $0xa0] sm:$0xff]
    %v153 = vld [vmem:[#allocation2 + $0xa8] sm:$0xff]
    %v154 = vld [vmem:[#allocation2 + $0xb0] sm:$0xff]
    %v155 = vld [vmem:[#allocation2 + $0xb8] sm:$0xff]
    %v156 = vld [vmem:[#allocation2 + $0xc0] sm:$0xff]
    %v157 = vld [vmem:[#allocation2 + $0xc8] sm:$0xff]
    %v158 = vld [vmem:[#allocation2 + $0xd0] sm:$0xff]
    %v159 = vld [vmem:[#allocation2 + $0xd8] sm:$0xff]
    %v160 = vld [vmem:[#allocation2 + $0xe0] sm:$0xff]
    %v161 = vld [vmem:[#allocation2 + $0xe8] sm:$0xff]
    %v162 = vld [vmem:[#allocation2 + $0xf0] sm:$0xff]
    %v163 = vld [vmem:[#allocation2 + $0xf8] sm:$0xff]
    %v164 = vld [vmem:[%s4] sm:$0x1]
    %v166 = vlaneseq
    %v167 = vshrl.u32 %v166, 7
    %v168 = vsub.s32 0, %v167
    %v169 = vrot.slane %v164, %v168
    %171 = vmatprep.subr.mxu0 0.0
    %172 = vmatpush1.msra.mxu0 %v132
    %173 = vmatprep.subr.mxu0 0.0
    %174 = vmatpush1.msra.mxu0 %v133
    %175 = vmatprep.subr.mxu0 0.0
    %176 = vmatpush1.msra.mxu0 %v134
    %177 = vmatprep.subr.mxu0 0.0
    %178 = vmatpush1.msra.mxu0 %v135
    %179 = vmatprep.subr.mxu0 0.0
    %180 = vmatpush1.msra.mxu0 %v136
    %181 = vmatprep.subr.mxu0 0.0
    %182 = vmatpush1.msra.mxu0 %v137
    %183 = vmatprep.subr.mxu0 0.0
    %184 = vmatpush1.msra.mxu0 %v138
    %185 = vmatprep.subr.mxu0 0.0
    %186 = vmatpush1.msra.mxu0 %v139
    %187 = vmatprep.subr.mxu0 0.0
    %188 = vmatpush1.msra.mxu0 %v140
    %189 = vmatprep.subr.mxu0 0.0
    %190 = vmatpush1.msra.mxu0 %v141
    %191 = vmatprep.subr.mxu0 0.0
    %192 = vmatpush1.msra.mxu0 %v142
    %193 = vmatprep.subr.mxu0 0.0
    %194 = vmatpush1.msra.mxu0 %v143
    %195 = vmatprep.subr.mxu0 0.0
    %196 = vmatpush1.msra.mxu0 %v144
    %197 = vmatprep.subr.mxu0 0.0
    %198 = vmatpush1.msra.mxu0 %v145
    %199 = vmatprep.subr.mxu0 0.0
    %200 = vmatpush1.msra.mxu0 %v146
    %201 = vmatprep.subr.mxu0 0.0
    %202 = vmatpush1.msra.mxu0 %v147
    %203 = vmatprep.subr.mxu0 0.0
    %204 = vmatpush1.msra.mxu0 %v148
    %205 = vmatprep.subr.mxu0 0.0
    %206 = vmatpush1.msra.mxu0 %v149
    %207 = vmatprep.subr.mxu0 0.0
    %208 = vmatpush1.msra.mxu0 %v150
    %209 = vmatprep.subr.mxu0 0.0
    %210 = vmatpush1.msra.mxu0 %v151
    %211 = vmatprep.subr.mxu0 0.0
    %212 = vmatpush1.msra.mxu0 %v152
    %213 = vmatprep.subr.mxu0 0.0
    %214 = vmatpush1.msra.mxu0 %v153
    %215 = vmatprep.subr.mxu0 0.0
    %216 = vmatpush1.msra.mxu0 %v154
    %217 = vmatprep.subr.mxu0 0.0
    %218 = vmatpush1.msra.mxu0 %v155
    %219 = vmatprep.subr.mxu0 0.0
    %220 = vmatpush1.msra.mxu0 %v156
    %221 = vmatprep.subr.mxu0 0.0
    %222 = vmatpush1.msra.mxu0 %v157
    %223 = vmatprep.subr.mxu0 0.0
    %224 = vmatpush1.msra.mxu0 %v158
    %225 = vmatprep.subr.mxu0 0.0
    %226 = vmatpush1.msra.mxu0 %v159
    %227 = vmatprep.subr.mxu0 0.0
    %228 = vmatpush1.msra.mxu0 %v160
    %229 = vmatprep.subr.mxu0 0.0
    %230 = vmatpush1.msra.mxu0 %v161
    %231 = vmatprep.subr.mxu0 0.0
    %232 = vmatpush1.msra.mxu0 %v162
    %233 = vmatprep.subr.mxu0 0.0
    %234 = vmatpush1.msra.mxu0 %v163
    %235 = vmatprep.mubr.f32.mxu0 %v131
    %236 = vmatmul.mubr.f32.gmra.mrb[0].mxu0 %v130
    %v237 = vpop.f32.mrb[0].mxu0
    %v238 = vadd.f32 %v169, %v237
    %v239 = vpop.f32.mrb[0].mxu0
    %240 = vdwg.mxu0
    %v241 = vmax.f32 %v238, 0.0
    %v242 = vld [vmem:[%s5] sm:$0xff]
    %v243 = vld [vmem:[%s5 + $0x8] sm:$0xff]
    %v244 = vld [vmem:[%s5 + $0x10] sm:$0xff]
    %v245 = vld [vmem:[%s5 + $0x18] sm:$0xff]
    %v246 = vld [vmem:[%s5 + $0x20] sm:$0xff]
    %v247 = vld [vmem:[%s5 + $0x28] sm:$0xff]
    %v248 = vld [vmem:[%s5 + $0x30] sm:$0xff]
    %v249 = vld [vmem:[%s5 + $0x38] sm:$0xff]
    %v250 = vld [vmem:[%s5 + $0x40] sm:$0xff]
    %v251 = vld [vmem:[%s5 + $0x48] sm:$0xff]
    %v252 = vld [vmem:[%s5 + $0x50] sm:$0xff]
    %v253 = vld [vmem:[%s5 + $0x58] sm:$0xff]
    %v254 = vld [vmem:[%s5 + $0x60] sm:$0xff]
    %v255 = vld [vmem:[%s5 + $0x68] sm:$0xff]
    %v256 = vld [vmem:[%s5 + $0x70] sm:$0xff]
    %v257 = vld [vmem:[%s5 + $0x78] sm:$0xff]
    %v258 = vld [vmem:[%s6] sm:$0x1]
    %v260 = vlaneseq
    %v261 = vshrl.u32 %v260, 7
    %v262 = vsub.s32 0, %v261
    %v263 = vrot.slane %v258, %v262
    %265 = vmatprep.subr.mxu0 0.0
    %266 = vmatpush1.msra.mxu0 %v242
    %267 = vmatprep.subr.mxu0 0.0
    %268 = vmatpush1.msra.mxu0 %v243
    %269 = vmatprep.subr.mxu0 0.0
    %270 = vmatpush1.msra.mxu0 %v244
    %271 = vmatprep.subr.mxu0 0.0
    %272 = vmatpush1.msra.mxu0 %v245
    %273 = vmatprep.subr.mxu0 0.0
    %274 = vmatpush1.msra.mxu0 %v246
    %275 = vmatprep.subr.mxu0 0.0
    %276 = vmatpush1.msra.mxu0 %v247
    %277 = vmatprep.subr.mxu0 0.0
    %278 = vmatpush1.msra.mxu0 %v248
    %279 = vmatprep.subr.mxu0 0.0
    %280 = vmatpush1.msra.mxu0 %v249
    %281 = vmatprep.subr.mxu0 0.0
    %282 = vmatpush1.msra.mxu0 %v250
    %283 = vmatprep.subr.mxu0 0.0
    %284 = vmatpush1.msra.mxu0 %v251
    %285 = vmatprep.subr.mxu0 0.0
    %286 = vmatpush1.msra.mxu0 %v252
    %287 = vmatprep.subr.mxu0 0.0
    %288 = vmatpush1.msra.mxu0 %v253
    %289 = vmatprep.subr.mxu0 0.0
    %290 = vmatpush1.msra.mxu0 %v254
    %291 = vmatprep.subr.mxu0 0.0
    %292 = vmatpush1.msra.mxu0 %v255
    %293 = vmatprep.subr.mxu0 0.0
    %294 = vmatpush1.msra.mxu0 %v256
    %295 = vmatprep.subr.mxu0 0.0
    %296 = vmatpush1.msra.mxu0 %v257
    %297 = vmatprep.subr.mxu0 0.0
    %298 = vmatpush1.msra.mxu0 0.0
    %299 = vmatprep.subr.mxu0 0.0
    %300 = vmatpush1.msra.mxu0 0.0
    %301 = vmatprep.subr.mxu0 0.0
    %302 = vmatpush1.msra.mxu0 0.0
    %303 = vmatprep.subr.mxu0 0.0
    %304 = vmatpush1.msra.mxu0 0.0
    %305 = vmatprep.subr.mxu0 0.0
    %306 = vmatpush1.msra.mxu0 0.0
    %307 = vmatprep.subr.mxu0 0.0
    %308 = vmatpush1.msra.mxu0 0.0
    %309 = vmatprep.subr.mxu0 0.0
    %310 = vmatpush1.msra.mxu0 0.0
    %311 = vmatprep.subr.mxu0 0.0
    %312 = vmatpush1.msra.mxu0 0.0
    %313 = vmatprep.subr.mxu0 0.0
    %314 = vmatpush1.msra.mxu0 0.0
    %315 = vmatprep.subr.mxu0 0.0
    %316 = vmatpush1.msra.mxu0 0.0
    %317 = vmatprep.subr.mxu0 0.0
    %318 = vmatpush1.msra.mxu0 0.0
    %319 = vmatprep.subr.mxu0 0.0
    %320 = vmatpush1.msra.mxu0 0.0
    %321 = vmatprep.subr.mxu0 0.0
    %322 = vmatpush1.msra.mxu0 0.0
    %323 = vmatprep.subr.mxu0 0.0
    %324 = vmatpush1.msra.mxu0 0.0
    %325 = vmatprep.subr.mxu0 0.0
    %326 = vmatpush1.msra.mxu0 0.0
    %327 = vmatprep.subr.mxu0 0.0
    %328 = vmatpush1.msra.mxu0 0.0
    %329 = vmatprep.mubr.f32.mxu0 0.0
    %330 = vmatmul.mubr.f32.gmra.mrb[0].mxu0 %v241
    %v331 = vpop.f32.mrb[0].mxu0
    %v332 = vadd.f32 %v263, %v331
    %v333 = vpop.f32.mrb[0].mxu0
    %334 = vdwg.mxu0
    %vm335 = vcmask 31744
    %336 = vst.msk [vmem:[%s7] sm:$0xff] %vm335, %v332
    // Predicated region
    $region34: #{dqn_forward.1} parent=1 // pred_check
      _
    $region35: #{dqn_forward.1} parent=1 // pred_check_branch
      %338 = sbr.rel (0) target = $region37
    $region36: #{dqn_forward.1} parent=1 // pred_region
      _
    $region37: #{dqn_forward.1} parent=1 // pred_fallthru
      _
    // Predicated region
    $region38: #{dqn_forward.1} parent=1 // pred_check
      _
    $region39: #{dqn_forward.1} parent=1 // pred_check_branch
      %340 = sbr.rel (0) target = $region41
    $region40: #{dqn_forward.1} parent=1 // pred_region
      _
    $region41: #{dqn_forward.1} parent=1 // pred_fallthru
      _
    %341 = vsyncpa [#allocation3], 1

</llo_original>
